<compile_context>
chip_gen: v7x
topology: tpu7x:2x2x1
jax: 0.10.0
libtpu: 0.0.40
codegen_flags: <defaults>
</compile_context>

<pallas_src>
import functools

import jax
import jax.numpy as jnp
from jax.experimental import pallas as pl
from jax.experimental.pallas import tpu as pltpu

EPS = 1e-5


def _gbn_kernel_packed(x_ref, gamma_ref, beta_ref, o_ref, *, n_rows, feat, lanes):
    """Lane-packed path. x_ref: (K, vbs//L, L*feat) with L*feat == lanes (128).

    Column c of a chunk's packed view holds feature (c % feat); summing the
    column statistics over all L lane-groups (done with a log2(L)-step tree of
    circular lane rolls by multiples of `feat`) yields per-feature statistics
    replicated across the lane groups — exactly the layout needed to broadcast
    them back onto the packed data.
    """
    L = lanes // feat
    inv_n = 1.0 / float(n_rows)

    x = x_ref[...].astype(jnp.float32)                         # (K, R, lanes)

    def lane_group_sum(col):
        # col: (K, 1, lanes). L is a power of two (128 % feat == 0), so a
        # doubling-shift tree covers all L lane groups in log2(L) rolls.
        tot = col
        step = feat
        while step < lanes:
            tot = tot + pltpu.roll(tot, shift=step, axis=2)
            step *= 2
        return tot

    col_sum = jnp.sum(x, axis=1, keepdims=True)                # (K, 1, lanes)
    mean = lane_group_sum(col_sum) * inv_n                     # per-feature, replicated

    centered = x - mean
    col_sq = jnp.sum(centered * centered, axis=1, keepdims=True)
    var = lane_group_sum(col_sq) * inv_n                       # biased variance

    inv_std = jax.lax.rsqrt(var + EPS)
    scale = gamma_ref[...] * inv_std                           # (1,lanes)*(K,1,lanes)
    shift = beta_ref[...] - mean * scale
    o_ref[...] = (x * scale + shift).astype(o_ref.dtype)


def _gbn_kernel_plain(x_ref, gamma_ref, beta_ref, o_ref, *, n_rows):
    """Plain path. x_ref: (K, vbs, D); stats over axis=1 (the ghost batch)."""
    inv_n = 1.0 / float(n_rows)

    x = x_ref[...].astype(jnp.float32)                         # (K, vbs, D)
    mean = jnp.sum(x, axis=1, keepdims=True) * inv_n           # (K, 1, D)
    centered = x - mean
    var = jnp.sum(centered * centered, axis=1, keepdims=True) * inv_n

    inv_std = jax.lax.rsqrt(var + EPS)
    scale = gamma_ref[...] * inv_std                           # (1,D)*(K,1,D)
    shift = beta_ref[...] - mean * scale
    o_ref[...] = (x * scale + shift).astype(o_ref.dtype)


def gbn_forward(x, gamma, beta, virtual_batch_size=128):
    """Ghost BatchNorm forward (training-mode statistics).

    x:     (B, D)
    gamma: (D,)  BN weight
    beta:  (D,)  BN bias
    """
    B, D = x.shape
    n_chunks = -(-B // virtual_batch_size)                     # ceil
    assert B % n_chunks == 0, "this kernel assumes equal-size ghost batches"
    vbs = B // n_chunks                                        # == torch.chunk size

    gamma_f = gamma.astype(jnp.float32).reshape(1, D)
    beta_f = beta.astype(jnp.float32).reshape(1, D)

    # --- pick K ghost batches per grid step so blocks are ~2 MiB (f32-equiv) ---
    target_f32_bytes = 2 * 1024 * 1024
    chunk_f32_bytes = vbs * D * 4
    k_cap = max(1, target_f32_bytes // chunk_f32_bytes)
    K = 1
    for k in range(min(int(k_cap), n_chunks), 0, -1):          # largest divisor <= cap
        if n_chunks % k == 0:
            K = k
            break
    grid = (n_chunks // K,)

    # --- layout: lane-pack narrow feature dims (D | 128) via free reshapes ---
    use_packed = (D < 128) and (128 % D == 0) and (D >= 4) and (vbs % (128 // D) == 0)
    if use_packed:
        L = 128 // D
        R = vbs // L
        lanes = 128
        xv = x.reshape(n_chunks, R, lanes)                     # free, row-major view
        g = jnp.tile(gamma_f, (1, L))                          # (1, 128), col c -> gamma[c % D]
        b = jnp.tile(beta_f, (1, L))
        kernel = functools.partial(_gbn_kernel_packed, n_rows=vbs, feat=D, lanes=lanes)
        block = (K, R, lanes)
        param_block = (1, lanes)
    else:
        # TODO(synk): for D < 128 that does not divide 128, output stores are
        #             lane-masked; acceptable because the kernel stays HBM-bound.
        xv = x.reshape(n_chunks, vbs, D)
        g, b = gamma_f, beta_f
        kernel = functools.partial(_gbn_kernel_plain, n_rows=vbs)
        block = (K, vbs, D)
        param_block = (1, D)

    # --- VMEM budget: 2x-buffered in + out blocks plus f32 working copies ---
    itemsize = jnp.dtype(x.dtype).itemsize
    block_bytes = K * vbs * D * itemsize
    f32_block_bytes = K * vbs * D * 4
    vmem_needed = 4 * block_bytes + 6 * f32_block_bytes + (2 << 20)
    vmem_limit = int(min(max(vmem_needed, 16 << 20), 48 << 20))

    out = pl.pallas_call(
        kernel,
        out_shape=jax.ShapeDtypeStruct(xv.shape, x.dtype),
        grid_spec=pltpu.PrefetchScalarGridSpec(
            num_scalar_prefetch=0,
            grid=grid,
            in_specs=[
                pl.BlockSpec(block, lambda i: (i, 0, 0)),
                pl.BlockSpec(param_block, lambda i: (0, 0)),
                pl.BlockSpec(param_block, lambda i: (0, 0)),
            ],
            out_specs=pl.BlockSpec(block, lambda i: (i, 0, 0)),
        ),
        compiler_params=pltpu.CompilerParams(
            # each grid step is an independent group of ghost batches; on v7x
            # this lets the two TensorCores split the grid.
            dimension_semantics=("parallel",),
            vmem_limit_bytes=vmem_limit,
        ),
    )(xv, g, b)
    return out.reshape(B, D)


def gbn_reference(x, gamma, beta, virtual_batch_size):
    """Pure-JAX reference mirroring the PyTorch forward (training mode)."""
    B, D = x.shape
    n_chunks = -(-B // virtual_batch_size)
    chunks = jnp.split(x, n_chunks, axis=0)
    outs = []
    for c in chunks:
        cf = c.astype(jnp.float32)
        m = jnp.mean(cf, axis=0, keepdims=True)
        v = jnp.mean((cf - m) ** 2, axis=0, keepdims=True)
        outs.append(((cf - m) / jnp.sqrt(v + EPS)) * gamma + beta)
    return jnp.concatenate(outs, axis=0).astype(x.dtype)


if __name__ == "__main__":
    key = jax.random.PRNGKey(0)
    kx, kg, kb, kx2 = jax.random.split(key, 4)

    # Case 1: D divides 128 -> lane-packed path. 2 ghost batches of 8 rows.
    B, D, VBS = 16, 32, 8
    x = jax.random.normal(kx, (B, D), dtype=jnp.float32)
    gamma = 1.0 + 0.1 * jax.random.normal(kg, (D,), dtype=jnp.float32)
    beta = 0.1 * jax.random.normal(kb, (D,), dtype=jnp.float32)

    out = jax.block_until_ready(gbn_forward(x, gamma, beta, virtual_batch_size=VBS))
    ref = gbn_reference(x, gamma, beta, VBS)
    assert out.shape == (B, D)
    assert jnp.max(jnp.abs(out - ref)) < 1e-4, "packed-path mismatch vs reference"

    # Case 2: D does not divide 128 -> plain 3D path.
    D2 = 40
    x2 = jax.random.normal(kx2, (B, D2), dtype=jnp.float32)
    gamma2 = jnp.linspace(0.8, 1.2, D2, dtype=jnp.float32)
    beta2 = jnp.linspace(-0.1, 0.1, D2, dtype=jnp.float32)

    out2 = jax.block_until_ready(gbn_forward(x2, gamma2, beta2, virtual_batch_size=VBS))
    ref2 = gbn_reference(x2, gamma2, beta2, VBS)
    assert out2.shape == (B, D2)
    assert jnp.max(jnp.abs(out2 - ref2)) < 1e-4, "plain-path mismatch vs reference"

    print("KERNEL_OK")
</pallas_src>

<mosaic_0001>
module attributes {stable_mosaic.version = 11 : i64} {
  func.func @_gbn_kernel_packed(%arg0: i32, %arg1: memref<2x2x128xf32, #tpu.memory_space<vmem>>, %arg2: memref<1x128xf32, #tpu.memory_space<vmem>>, %arg3: memref<1x128xf32, #tpu.memory_space<vmem>>, %arg4: memref<2x2x128xf32, #tpu.memory_space<vmem>>) attributes {dimension_semantics = [#tpu.dimension_semantics<parallel>], iteration_bounds = array<i64: 1>, scalar_prefetch = 0 : i64, scratch_operands = 0 : i64, tpu.core_type = #tpu.core_type<tc>, window_params = [{transform_indices = @transform_0, window_bounds = array<i64: 2, 2, 128>}, {pipeline_mode = #tpu.pipeline_mode<synchronous>, transform_indices = @transform_1, window_bounds = array<i64: 1, 128>}, {pipeline_mode = #tpu.pipeline_mode<synchronous>, transform_indices = @transform_2, window_bounds = array<i64: 1, 128>}, {transform_indices = @transform_3, window_bounds = array<i64: 2, 2, 128>}]} {
    %c0 = arith.constant 0 : index
    %c0_0 = arith.constant 0 : index
    %c0_1 = arith.constant 0 : index
    %0 = vector.load %arg1[%c0, %c0_0, %c0_1] : memref<2x2x128xf32, #tpu.memory_space<vmem>>, vector<2x2x128xf32>
    %cst = arith.constant dense<0.000000e+00> : vector<2x128xf32>
    %1 = vector.multi_reduction <add>, %0, %cst [1] : vector<2x2x128xf32> to vector<2x128xf32>
    %2 = vector.shape_cast %1 : vector<2x128xf32> to vector<2x1x128xf32>
    %c32_i32 = arith.constant 32 : i32
    %3 = tpu.dynamic_rotate %2 by %c32_i32 dim 2 : vector<2x1x128xf32>, i32 -> vector<2x1x128xf32>
    %4 = arith.addf %2, %3 : vector<2x1x128xf32>
    %c64_i32 = arith.constant 64 : i32
    %5 = tpu.dynamic_rotate %4 by %c64_i32 dim 2 : vector<2x1x128xf32>, i32 -> vector<2x1x128xf32>
    %6 = arith.addf %4, %5 : vector<2x1x128xf32>
    %cst_2 = arith.constant 1.250000e-01 : f32
    %7 = vector.broadcast %cst_2 : f32 to vector<2x1x128xf32>
    %8 = arith.mulf %6, %7 : vector<2x1x128xf32>
    %9 = vector.broadcast %8 : vector<2x1x128xf32> to vector<2x2x128xf32>
    %10 = arith.subf %0, %9 : vector<2x2x128xf32>
    %11 = arith.mulf %10, %10 : vector<2x2x128xf32>
    %cst_3 = arith.constant dense<0.000000e+00> : vector<2x128xf32>
    %12 = vector.multi_reduction <add>, %11, %cst_3 [1] : vector<2x2x128xf32> to vector<2x128xf32>
    %13 = vector.shape_cast %12 : vector<2x128xf32> to vector<2x1x128xf32>
    %c32_i32_4 = arith.constant 32 : i32
    %14 = tpu.dynamic_rotate %13 by %c32_i32_4 dim 2 : vector<2x1x128xf32>, i32 -> vector<2x1x128xf32>
    %15 = arith.addf %13, %14 : vector<2x1x128xf32>
    %c64_i32_5 = arith.constant 64 : i32
    %16 = tpu.dynamic_rotate %15 by %c64_i32_5 dim 2 : vector<2x1x128xf32>, i32 -> vector<2x1x128xf32>
    %17 = arith.addf %15, %16 : vector<2x1x128xf32>
    %cst_6 = arith.constant 1.250000e-01 : f32
    %18 = vector.broadcast %cst_6 : f32 to vector<2x1x128xf32>
    %19 = arith.mulf %17, %18 : vector<2x1x128xf32>
    %cst_7 = arith.constant 9.99999974E-6 : f32
    %20 = vector.broadcast %cst_7 : f32 to vector<2x1x128xf32>
    %21 = arith.addf %19, %20 : vector<2x1x128xf32>
    %22 = math.rsqrt %21 : vector<2x1x128xf32>
    %c0_8 = arith.constant 0 : index
    %c0_9 = arith.constant 0 : index
    %23 = vector.load %arg2[%c0_8, %c0_9] : memref<1x128xf32, #tpu.memory_space<vmem>>, vector<1x128xf32>
    %24 = vector.shape_cast %23 : vector<1x128xf32> to vector<1x1x128xf32>
    %25 = vector.broadcast %24 : vector<1x1x128xf32> to vector<2x1x128xf32>
    %26 = arith.mulf %25, %22 : vector<2x1x128xf32>
    %c0_10 = arith.constant 0 : index
    %c0_11 = arith.constant 0 : index
    %27 = vector.load %arg3[%c0_10, %c0_11] : memref<1x128xf32, #tpu.memory_space<vmem>>, vector<1x128xf32>
    %28 = arith.mulf %8, %26 : vector<2x1x128xf32>
    %29 = vector.shape_cast %27 : vector<1x128xf32> to vector<1x1x128xf32>
    %30 = vector.broadcast %29 : vector<1x1x128xf32> to vector<2x1x128xf32>
    %31 = arith.subf %30, %28 : vector<2x1x128xf32>
    %32 = vector.broadcast %26 : vector<2x1x128xf32> to vector<2x2x128xf32>
    %33 = arith.mulf %0, %32 : vector<2x2x128xf32>
    %34 = vector.broadcast %31 : vector<2x1x128xf32> to vector<2x2x128xf32>
    %35 = arith.addf %33, %34 : vector<2x2x128xf32>
    %c0_12 = arith.constant 0 : index
    %c0_13 = arith.constant 0 : index
    %c0_14 = arith.constant 0 : index
    %36 = vector.load %arg4[%c0_12, %c0_13, %c0_14] : memref<2x2x128xf32, #tpu.memory_space<vmem>>, vector<2x2x128xf32>
    tpu.vector_store %arg4[%c0_12, %c0_13, %c0_14], %35 {strides = array<i32>} : memref<2x2x128xf32, #tpu.memory_space<vmem>>, vector<2x2x128xf32>,
    return
  }
  func.func @transform_0(%arg0: i32) -> (i32, i32, i32) {
    %c0_i32 = arith.constant 0 : i32
    %c0_i32_0 = arith.constant 0 : i32
    %c0_i32_1 = arith.constant 0 : i32
    return %arg0, %c0_i32, %c0_i32_0 : i32, i32, i32
  }
  func.func @transform_1(%arg0: i32) -> (i32, i32) {
    %c0_i32 = arith.constant 0 : i32
    %c0_i32_0 = arith.constant 0 : i32
    %c0_i32_1 = arith.constant 0 : i32
    return %c0_i32, %c0_i32_0 : i32, i32
  }
  func.func @transform_2(%arg0: i32) -> (i32, i32) {
    %c0_i32 = arith.constant 0 : i32
    %c0_i32_0 = arith.constant 0 : i32
    %c0_i32_1 = arith.constant 0 : i32
    return %c0_i32, %c0_i32_0 : i32, i32
  }
  func.func @transform_3(%arg0: i32) -> (i32, i32, i32) {
    %c0_i32 = arith.constant 0 : i32
    %c0_i32_0 = arith.constant 0 : i32
    %c0_i32_1 = arith.constant 0 : i32
    return %arg0, %c0_i32, %c0_i32_0 : i32, i32, i32
  }
}

</mosaic_0001>

<llo_original>
// kernel: tpu_custom_call.1
$region0: #{tpu_custom_call.1}
  #allocation0 [shape = 'u32[]', space=smem, size = 0x4, offset = 0x4, fixed_abs, tag = 'smem constant byte address 0x4 - core index']
  #allocation1 [shape = 'u32[144,128]{1,0:T(1,128)}', space=vmem, size = 0x12000, scoped, tag = 'internal scratch']
  %s0 = inlined_call_operand.hbm [shape: f32[2,2,128], index: 0, kind: input, shape index: {}]
  %s1 = inlined_call_operand.vmem [shape: f32[1,128], index: 1, kind: input, shape index: {}]
  %s2 = inlined_call_operand.vmem [shape: f32[1,128], index: 2, kind: input, shape index: {}]
  %s3 = inlined_call_operand.hbm [shape: f32[2,2,128], index: 3, kind: output, shape index: {}]
  %s4 = sld [smem:[#allocation0]]
  $region26: #{tpu_custom_call.1} parent=0
    _
  %s6 = ssub.s32 1, %s4
  %s7 = scalar_select 0, %s6, %s4
  $region1: #{tpu_custom_call.1} parent=0
    #allocation2 [shape = 'u8[2048]{0}', space=vmem, size = 0x800, scoped, tag = 'input window, operand 0, single buffered']
    #allocation3 [shape = 's32[1]{0}', space=sflag, size = 0x4, scoped, tag = 'scoped memory for tpu_custom_call.1']
    #allocation4 [shape = 's32[1]{0}', space=sflag, size = 0x4, scoped, tag = 'scoped memory for tpu_custom_call.1']
    #allocation5 [shape = 'u8[2048]{0}', space=vmem, size = 0x800, scoped, tag = 'output window, operand 0, single buffered']
    %8 = vsyncpa [#allocation3], 0
    %9 = vsyncpa [#allocation4], 0
    // Predicated region
    $region2: #{tpu_custom_call.1} parent=1 // pred_check
      _
    $region3: #{tpu_custom_call.1} parent=1 // pred_check_branch
      %11 = sbr.rel (0) target = $region5
    $region4: #{tpu_custom_call.1} parent=1 // pred_region
      %s13 = ssub.s32 64, 64
      %14 = vsyncadd [#allocation3], %s13
      %s15 = sshll.u32 [#allocation2], 4
      %s16 = int_to_ptr.vmem [resolvable:$true] %s15
      %21 = dma.hbm_to_vmem [thread:$0]  %s0, 64, %s16, [#allocation3], 32, 32, 2
    $region5: #{tpu_custom_call.1} parent=1 // pred_fallthru
      _
    // Predicated region
    $region6: #{tpu_custom_call.1} parent=1 // pred_check
      _
    $region7: #{tpu_custom_call.1} parent=1 // pred_check_branch
      %23 = sbr.rel (0) target = $region9
    $region8: #{tpu_custom_call.1} parent=1 // pred_region
      _
    $region9: #{tpu_custom_call.1} parent=1 // pred_fallthru
      _
    // Predicated region
    $region10: #{tpu_custom_call.1} parent=1 // pred_check
      _
    $region11: #{tpu_custom_call.1} parent=1 // pred_check_branch
      %25 = sbr.rel (0) target = $region13
    $region12: #{tpu_custom_call.1} parent=1 // pred_region
      _
    $region13: #{tpu_custom_call.1} parent=1 // pred_fallthru
      _
    // Predicated region
    $region14: #{tpu_custom_call.1} parent=1 // pred_check
      _
    $region15: #{tpu_custom_call.1} parent=1 // pred_check_branch
      %27 = sbr.rel (0) target = $region17
    $region16: #{tpu_custom_call.1} parent=1 // pred_region
      %28 = dma.done [#allocation3], 64
    $region17: #{tpu_custom_call.1} parent=1 // pred_fallthru
      _
    %v29 = vld [vmem:[#allocation2] sm:$0x3]
    %v30 = vld [vmem:[#allocation2 + $0x2] sm:$0x3]
    %vm31 = vcmask 1041408
    %v32 = vsel %vm31, %v29, 0.0
    %v33 = vrot.slane %v32, 4
    %v34 = vadd.f32 %v32, %v33
    %v35 = vrot.slane %v34, 2
    %v36 = vadd.f32 %v34, %v35
    %v37 = vrot.slane %v36, 1
    %v38 = vadd.f32 %v36, %v37
    %v39 = vsel %vm31, %v30, 0.0
    %v40 = vrot.slane %v39, 4
    %v41 = vadd.f32 %v39, %v40
    %v42 = vrot.slane %v41, 2
    %v43 = vadd.f32 %v41, %v42
    %v44 = vrot.slane %v43, 1
    %v45 = vadd.f32 %v43, %v44
    %46 = vrot.lane.b32.xlu0 %v38, 32
    %v47 = vpop.permute.xlu0 %46
    %48 = vrot.lane.b32.xlu0 %v45, 32
    %v49 = vpop.permute.xlu0 %48
    %v50 = vadd.f32 %v38, %v47
    %v51 = vadd.f32 %v45, %v49
    %52 = vrot.lane.b32.xlu0 %v50, 64
    %v53 = vpop.permute.xlu0 %52
    %54 = vrot.lane.b32.xlu0 %v51, 64
    %v55 = vpop.permute.xlu0 %54
    %v56 = vadd.f32 %v50, %v53
    %v57 = vadd.f32 %v51, %v55
    %v58 = vmul.f32 %v56, 0.125
    %v59 = vmul.f32 %v57, 0.125
    %v60 = vlaneseq
    %v61 = vshrl.u32 %v60, 7
    %v62 = vsub.s32 0, %v61
    %v63 = vrot.slane %v58, %v62
    %v64 = vlaneseq
    %v65 = vshrl.u32 %v64, 7
    %v66 = vsub.s32 0, %v65
    %v67 = vrot.slane %v59, %v66
    %v68 = vsub.f32 %v29, %v63
    %v69 = vsub.f32 %v30, %v67
    %v70 = vmul.f32 %v68, %v68
    %v71 = vmul.f32 %v69, %v69
    %v72 = vsel %vm31, %v70, 0.0
    %v73 = vrot.slane %v72, 4
    %v74 = vadd.f32 %v72, %v73
    %v75 = vrot.slane %v74, 2
    %v76 = vadd.f32 %v74, %v75
    %v77 = vrot.slane %v76, 1
    %v78 = vadd.f32 %v76, %v77
    %v79 = vsel %vm31, %v71, 0.0
    %v80 = vrot.slane %v79, 4
    %v81 = vadd.f32 %v79, %v80
    %v82 = vrot.slane %v81, 2
    %v83 = vadd.f32 %v81, %v82
    %v84 = vrot.slane %v83, 1
    %v85 = vadd.f32 %v83, %v84
    %86 = vrot.lane.b32.xlu0 %v78, 32
    %v87 = vpop.permute.xlu0 %86
    %88 = vrot.lane.b32.xlu0 %v85, 32
    %v89 = vpop.permute.xlu0 %88
    %v90 = vadd.f32 %v78, %v87
    %v91 = vadd.f32 %v85, %v89
    %92 = vrot.lane.b32.xlu0 %v90, 64
    %v93 = vpop.permute.xlu0 %92
    %94 = vrot.lane.b32.xlu0 %v91, 64
    %v95 = vpop.permute.xlu0 %94
    %v96 = vadd.f32 %v90, %v93
    %v97 = vadd.f32 %v91, %v95
    %v98 = vmul.f32 %v96, 0.125
    %v99 = vmul.f32 %v97, 0.125
    %v100 = vadd.f32 %v98, 1e-05
    %v101 = vadd.f32 %v99, 1e-05
    %v102 = vrsqrt.pop %v100
    %v103 = vrsqrt.pop %v101
    %v104 = vld [vmem:[%s1] sm:$0x1]
    %v105 = vmul.f32 %v104, %v102
    %v106 = vmul.f32 %v104, %v103
    %v107 = vld [vmem:[%s2] sm:$0x1]
    %v108 = vmul.f32 %v58, %v105
    %v109 = vmul.f32 %v59, %v106
    %v110 = vsub.f32 %v107, %v108
    %v111 = vsub.f32 %v107, %v109
    %v114 = vlaneseq
    %v115 = vshrl.u32 %v114, 7
    %v116 = vsub.s32 0, %v115
    %v117 = vrot.slane %v105, %v116
    %v118 = vlaneseq
    %v119 = vshrl.u32 %v118, 7
    %v120 = vsub.s32 0, %v119
    %v121 = vrot.slane %v106, %v120
    %v124 = vmul.f32 %v29, %v117
    %v125 = vmul.f32 %v30, %v121
    %v128 = vlaneseq
    %v129 = vshrl.u32 %v128, 7
    %v130 = vsub.s32 0, %v129
    %v131 = vrot.slane %v110, %v130
    %v132 = vlaneseq
    %v133 = vshrl.u32 %v132, 7
    %v134 = vsub.s32 0, %v133
    %v135 = vrot.slane %v111, %v134
    %v138 = vadd.f32 %v124, %v131
    %v139 = vadd.f32 %v125, %v135
    %140 = vst [vmem:[#allocation5] sm:$0x3] %v138
    %141 = vst [vmem:[#allocation5 + $0x2] sm:$0x3] %v139
    // Predicated region
    $region18: #{tpu_custom_call.1} parent=1 // pred_check
      _
    $region19: #{tpu_custom_call.1} parent=1 // pred_check_branch
      %143 = sbr.rel (0) target = $region21
    $region20: #{tpu_custom_call.1} parent=1 // pred_region
      %s145 = ssub.s32 64, 64
      %146 = vsyncadd [#allocation4], %s145
      %s147 = sshll.u32 [#allocation5], 4
      %s148 = int_to_ptr.vmem [resolvable:$true] %s147
      %153 = dma.vmem_to_hbm [thread:$0]  %s148, 64, %s3, [#allocation4], 32, 32, 2
    $region21: #{tpu_custom_call.1} parent=1 // pred_fallthru
      _
    // Predicated region
    $region22: #{tpu_custom_call.1} parent=1 // pred_check
      _
    $region23: #{tpu_custom_call.1} parent=1 // pred_check_branch
      %155 = sbr.rel (0) target = $region25
    $region24: #{tpu_custom_call.1} parent=1 // pred_region
      %156 = dma.done [#allocation4], 64
    $region25: #{tpu_custom_call.1} parent=1 // pred_fallthru
      _
    %157 = vsyncpa [#allocation3], 1
    %158 = vsyncpa [#allocation4], 1

</llo_original>
